<compile_context>
chip_gen: v7x
topology: tpu7x:2x2x1
jax: 0.10.0
libtpu: 0.0.40
codegen_flags: <defaults>
</compile_context>

<pallas_src>
import functools

import jax
import jax.numpy as jnp
from jax.experimental import pallas as pl
from jax.experimental.pallas import tpu as pltpu

_LANE = 128                          # lane width of the 2-D row layout
_SUBLANE = 8
_MIN_ROW_BLOCK = _SUBLANE * _LANE    # 1024 rows == one full (8,128) f32 vreg of outputs


def _binary_classifier_kernel(w_sref, b_sref, xt_ref, o_ref):
    # w_sref: (F,)          f32 SMEM  (scalar-prefetched weights)
    # b_sref: (1,)          f32 SMEM  (scalar-prefetched bias)
    # xt_ref: (F, TR, 128)  f32 VMEM  (feature-major; rows mapped to (sublane, lane))
    # o_ref:  (TR, 128)     f32 VMEM  (lane- AND sublane-dense probabilities)
    f = xt_ref.shape[0]
    # Unrolled F-term FMA on the VPU (K=6, N=1 is far too small for the MXU).
    acc = xt_ref[0] * w_sref[0]
    for k in range(1, f):
        acc = acc + xt_ref[k] * w_sref[k]
    o_ref[...] = jax.nn.sigmoid(acc + b_sref[0])


@functools.partial(jax.jit, static_argnames=("block_rows",))
def binary_classifier(x, w, b, *, block_rows=131072):
    """sigmoid(x @ w + b) for x:[N,F], w:[F,1], b:[1,1] -> [N,1], as a tiled Pallas kernel."""
    n, f = x.shape
    x = x.astype(jnp.float32)
    w_flat = jnp.asarray(w, jnp.float32).reshape(-1)     # (F,)  -> SMEM
    b_flat = jnp.asarray(b, jnp.float32).reshape(-1)     # (1,)  -> SMEM

    # Rows per grid step: a multiple of 8*128, clamped to the (rounded-up) row count.
    block_rows = max(_MIN_ROW_BLOCK, (block_rows // _MIN_ROW_BLOCK) * _MIN_ROW_BLOCK)
    rows_per_step = min(block_rows, pl.cdiv(n, _MIN_ROW_BLOCK) * _MIN_ROW_BLOCK)
    n_pad = pl.cdiv(n, rows_per_step) * rows_per_step
    tr = rows_per_step // _LANE                          # sublane extent of a tile (mult. of 8)

    # Dense layout: [N,F] -> [F,N] (transpose: the only extra HBM pass) -> [F, N/128, 128]
    # (contiguous reshape: free).  Row i lives at (i // 128, i % 128).
    x_t = x.T                                            # (F, N)
    if n_pad != n:
        x_t = jnp.pad(x_t, ((0, 0), (0, n_pad - n)))     # zero-pad ragged tail
    x3 = x_t.reshape(f, n_pad // _LANE, _LANE)

    grid = (n_pad // rows_per_step,)

    out = pl.pallas_call(
        _binary_classifier_kernel,
        out_shape=jax.ShapeDtypeStruct((n_pad // _LANE, _LANE), jnp.float32),
        grid_spec=pltpu.PrefetchScalarGridSpec(
            num_scalar_prefetch=2,                       # w, b land in SMEM before the grid
            grid=grid,
            in_specs=[
                pl.BlockSpec((f, tr, _LANE), lambda i, w_ref, b_ref: (0, i, 0)),
            ],
            out_specs=pl.BlockSpec((tr, _LANE), lambda i, w_ref, b_ref: (i, 0)),
        ),
        compiler_params=pltpu.CompilerParams(
            dimension_semantics=("parallel",),           # shard the row axis across TCs on v7x
        ),
    )(w_flat, b_flat, x3)

    return out.reshape(n_pad, 1)[:n]                     # (N, 1)


def edge_encoder(feats, src_emb=None, dst_emb=None, encoding_method="Hadamard"):
    """Mirrors Model.edge_encoder: computes `codes`/`combined_feats` but, exactly like the
    reference implementation, returns only the raw 6 edge features (early return)."""
    if src_emb is not None and dst_emb is not None:
        if encoding_method == "Average":
            codes = (src_emb + dst_emb) / 2.0
        elif encoding_method == "Hadamard":
            codes = src_emb * dst_emb
        elif encoding_method == "WeightedL1":
            codes = jnp.abs(src_emb - dst_emb)
        elif encoding_method == "WeightedL2":
            codes = (src_emb - dst_emb) ** 2
        else:
            raise ValueError("Unsupported encoding method")
        _combined = jnp.concatenate((codes, feats), axis=1)  # dead value, matches reference
    return feats


def model_forward(feats, w, b, *, block_rows=131072):
    """Model.forward: X = edge_encoder(test_data) -> pred(X)."""
    x = edge_encoder(feats).astype(jnp.float32)
    return binary_classifier(x, w, b, block_rows=block_rows)


if __name__ == "__main__":
    key = jax.random.PRNGKey(0)
    k_feat, k_w, k_b = jax.random.split(key, 3)

    n_feat = 6   # ['pktperflow','byteperflow','tot_dur','flows','pktrate','tot_kbps']

    # Deterministic synthetic classifier parameters.
    w = jax.random.normal(k_w, (n_feat, 1), dtype=jnp.float32) * 0.1
    b = jax.random.normal(k_b, (1, 1), dtype=jnp.float32) * 0.1

    # --- case 1: small edge set (single tile, heavy padding path) ---
    n_edges = 8
    feats = jax.random.normal(k_feat, (n_edges, n_feat), dtype=jnp.float32)
    y_pred = model_forward(feats, w, b)
    jax.block_until_ready(y_pred)
    ref = jax.nn.sigmoid(feats @ w + b)
    assert y_pred.shape == (n_edges, 1)
    assert jnp.allclose(y_pred, ref, atol=1e-5), "mismatch vs reference (N=8)"

    # --- case 2: multi-tile + ragged tail (exercises tiling, padding, pipelining) ---
    n_edges2 = 5000
    feats2 = jax.random.normal(k_feat, (n_edges2, n_feat), dtype=jnp.float32)
    y_pred2 = model_forward(feats2, w, b, block_rows=1024)   # grid=(5,), tail padded 5000->5120
    jax.block_until_ready(y_pred2)
    ref2 = jax.nn.sigmoid(feats2 @ w + b)
    assert y_pred2.shape == (n_edges2, 1)
    assert jnp.allclose(y_pred2, ref2, atol=1e-5), "mismatch vs reference (N=5000)"

    print("KERNEL_OK")
</pallas_src>

<mosaic_0001>
module attributes {stable_mosaic.version = 11 : i64} {
  func.func @_binary_classifier_kernel(%arg0: i32, %arg1: memref<6xf32, #tpu.memory_space<smem>>, %arg2: memref<1xf32, #tpu.memory_space<smem>>, %arg3: memref<6x8x128xf32, #tpu.memory_space<vmem>>, %arg4: memref<8x128xf32, #tpu.memory_space<vmem>>) attributes {dimension_semantics = [#tpu.dimension_semantics<parallel>], iteration_bounds = array<i64: 1>, scalar_prefetch = 2 : i64, scratch_operands = 0 : i64, tpu.core_type = #tpu.core_type<tc>, window_params = [{transform_indices = @transform_0, window_bounds = array<i64: 6, 8, 128>}, {transform_indices = @transform_1, window_bounds = array<i64: 8, 128>}]} {
    %c0 = arith.constant 0 : index
    %c0_0 = arith.constant 0 : index
    %c0_1 = arith.constant 0 : index
    %0 = vector.load %arg3[%c0, %c0_0, %c0_1] : memref<6x8x128xf32, #tpu.memory_space<vmem>>, vector<1x8x128xf32>
    %1 = vector.shape_cast %0 : vector<1x8x128xf32> to vector<8x128xf32>
    %c0_2 = arith.constant 0 : index
    %2 = memref.load %arg1[%c0_2] : memref<6xf32, #tpu.memory_space<smem>>
    %3 = vector.broadcast %2 : f32 to vector<8x128xf32>
    %4 = arith.mulf %1, %3 : vector<8x128xf32>
    %c1 = arith.constant 1 : index
    %c0_3 = arith.constant 0 : index
    %c0_4 = arith.constant 0 : index
    %5 = vector.load %arg3[%c1, %c0_3, %c0_4] : memref<6x8x128xf32, #tpu.memory_space<vmem>>, vector<1x8x128xf32>
    %6 = vector.shape_cast %5 : vector<1x8x128xf32> to vector<8x128xf32>
    %c1_5 = arith.constant 1 : index
    %7 = memref.load %arg1[%c1_5] : memref<6xf32, #tpu.memory_space<smem>>
    %8 = vector.broadcast %7 : f32 to vector<8x128xf32>
    %9 = arith.mulf %6, %8 : vector<8x128xf32>
    %10 = arith.addf %4, %9 : vector<8x128xf32>
    %c2 = arith.constant 2 : index
    %c0_6 = arith.constant 0 : index
    %c0_7 = arith.constant 0 : index
    %11 = vector.load %arg3[%c2, %c0_6, %c0_7] : memref<6x8x128xf32, #tpu.memory_space<vmem>>, vector<1x8x128xf32>
    %12 = vector.shape_cast %11 : vector<1x8x128xf32> to vector<8x128xf32>
    %c2_8 = arith.constant 2 : index
    %13 = memref.load %arg1[%c2_8] : memref<6xf32, #tpu.memory_space<smem>>
    %14 = vector.broadcast %13 : f32 to vector<8x128xf32>
    %15 = arith.mulf %12, %14 : vector<8x128xf32>
    %16 = arith.addf %10, %15 : vector<8x128xf32>
    %c3 = arith.constant 3 : index
    %c0_9 = arith.constant 0 : index
    %c0_10 = arith.constant 0 : index
    %17 = vector.load %arg3[%c3, %c0_9, %c0_10] : memref<6x8x128xf32, #tpu.memory_space<vmem>>, vector<1x8x128xf32>
    %18 = vector.shape_cast %17 : vector<1x8x128xf32> to vector<8x128xf32>
    %c3_11 = arith.constant 3 : index
    %19 = memref.load %arg1[%c3_11] : memref<6xf32, #tpu.memory_space<smem>>
    %20 = vector.broadcast %19 : f32 to vector<8x128xf32>
    %21 = arith.mulf %18, %20 : vector<8x128xf32>
    %22 = arith.addf %16, %21 : vector<8x128xf32>
    %c4 = arith.constant 4 : index
    %c0_12 = arith.constant 0 : index
    %c0_13 = arith.constant 0 : index
    %23 = vector.load %arg3[%c4, %c0_12, %c0_13] : memref<6x8x128xf32, #tpu.memory_space<vmem>>, vector<1x8x128xf32>
    %24 = vector.shape_cast %23 : vector<1x8x128xf32> to vector<8x128xf32>
    %c4_14 = arith.constant 4 : index
    %25 = memref.load %arg1[%c4_14] : memref<6xf32, #tpu.memory_space<smem>>
    %26 = vector.broadcast %25 : f32 to vector<8x128xf32>
    %27 = arith.mulf %24, %26 : vector<8x128xf32>
    %28 = arith.addf %22, %27 : vector<8x128xf32>
    %c5 = arith.constant 5 : index
    %c0_15 = arith.constant 0 : index
    %c0_16 = arith.constant 0 : index
    %29 = vector.load %arg3[%c5, %c0_15, %c0_16] : memref<6x8x128xf32, #tpu.memory_space<vmem>>, vector<1x8x128xf32>
    %30 = vector.shape_cast %29 : vector<1x8x128xf32> to vector<8x128xf32>
    %c5_17 = arith.constant 5 : index
    %31 = memref.load %arg1[%c5_17] : memref<6xf32, #tpu.memory_space<smem>>
    %32 = vector.broadcast %31 : f32 to vector<8x128xf32>
    %33 = arith.mulf %30, %32 : vector<8x128xf32>
    %34 = arith.addf %28, %33 : vector<8x128xf32>
    %c0_18 = arith.constant 0 : index
    %35 = memref.load %arg2[%c0_18] : memref<1xf32, #tpu.memory_space<smem>>
    %36 = vector.broadcast %35 : f32 to vector<8x128xf32>
    %37 = arith.addf %34, %36 : vector<8x128xf32>
    %38 = arith.negf %37 : vector<8x128xf32>
    %39 = math.exp %38 : vector<8x128xf32>
    %cst = arith.constant 1.000000e+00 : f32
    %40 = vector.broadcast %cst : f32 to vector<8x128xf32>
    %41 = arith.addf %40, %39 : vector<8x128xf32>
    %42 = arith.divf %40, %41 : vector<8x128xf32>
    %c0_19 = arith.constant 0 : index
    %c0_20 = arith.constant 0 : index
    %43 = vector.load %arg4[%c0_19, %c0_20] : memref<8x128xf32, #tpu.memory_space<vmem>>, vector<8x128xf32>
    tpu.vector_store %arg4[%c0_19, %c0_20], %42 {strides = array<i32>} : memref<8x128xf32, #tpu.memory_space<vmem>>, vector<8x128xf32>,
    return
  }
  func.func @transform_0(%arg0: i32, %arg1: memref<6xf32, #tpu.memory_space<smem>>, %arg2: memref<1xf32, #tpu.memory_space<smem>>) -> (i32, i32, i32) {
    %c0_i32 = arith.constant 0 : i32
    %c0_i32_0 = arith.constant 0 : i32
    %c0_i32_1 = arith.constant 0 : i32
    return %c0_i32, %arg0, %c0_i32_0 : i32, i32, i32
  }
  func.func @transform_1(%arg0: i32, %arg1: memref<6xf32, #tpu.memory_space<smem>>, %arg2: memref<1xf32, #tpu.memory_space<smem>>) -> (i32, i32) {
    %c0_i32 = arith.constant 0 : i32
    %c0_i32_0 = arith.constant 0 : i32
    return %arg0, %c0_i32 : i32, i32
  }
}

</mosaic_0001>

<llo_original>
// kernel: binary_classifier.1
$region0: #{binary_classifier.1}
  #allocation0 [shape = 'u32[]', space=smem, size = 0x4, offset = 0x4, fixed_abs, tag = 'smem constant byte address 0x4 - core index']
  #allocation1 [shape = 'u32[144,128]{1,0:T(1,128)}', space=vmem, size = 0x12000, scoped, tag = 'internal scratch']
  #allocation2 [shape = 's32[1]{0}', space=sflag, size = 0x4, scoped, tag = 'scoped memory for binary_classifier.1']
  #allocation3 [shape = 'u8[512]{0}', space=smem, size = 0x200, scoped, tag = 'prefetched SMEM operand 0']
  #allocation4 [shape = 'f32[1]{0:T(128)S(6)}', space=smem, size = 0x200, scoped, tag = 'prefetched SMEM operand 1']
  %s0 = inlined_call_operand.vmem [shape: f32[6], index: 0, kind: input, shape index: {}]
  %s1 = inlined_call_operand.<no memory space> [shape: f32[1], index: 1, kind: input, shape index: {}]
  %s2 = inlined_call_operand.vmem [shape: f32[6,8,128], index: 2, kind: input, shape index: {}]
  %s3 = inlined_call_operand.vmem [shape: f32[8,128], index: 3, kind: output, shape index: {}]
  %s4 = sld [smem:[#allocation0]]
  $region14: #{binary_classifier.1} parent=0
    _
  %s6 = ssub.s32 1, %s4
  %s7 = scalar_select 0, %s6, %s4
  %s8 = sshll.u32 %s0, 4
  %s9 = int_to_ptr.vmem [resolvable:$true] %s8
  %11 = dma.vmem_to_smem %s9, 16, [#allocation3], [#allocation2]
  %12 = sst [smem:[#allocation4]] %s1
  %13 = dma.done [#allocation2], 16
  %14 = sfence
  // Predicated region
  $region2: #{binary_classifier.1} parent=0 // pred_check
    _
  $region3: #{binary_classifier.1} parent=0 // pred_check_branch
    %16 = sbr.rel (0) target = $region5
  $region4: #{binary_classifier.1} parent=0 // pred_region
    _
  $region5: #{binary_classifier.1} parent=0 // pred_fallthru
    _
  %v17 = vld [vmem:[%s2] sm:$0xff]
  %s18 = sld [smem:[#allocation3]]
  %v19 = vstv %s18
  %v20 = vmul.f32 %v17, %v19
  %s21 = scalar_lea.vmem %s2, 8
  %v22 = vld [vmem:[%s21] sm:$0xff]
  %s23 = sld [smem:[#allocation3 + $0x1]]
  %v24 = vstv %s23
  %v25 = vmul.f32 %v22, %v24
  %v26 = vadd.f32 %v20, %v25
  %s27 = scalar_lea.vmem %s2, 16
  %v28 = vld [vmem:[%s27] sm:$0xff]
  %s29 = sld [smem:[#allocation3 + $0x2]]
  %v30 = vstv %s29
  %v31 = vmul.f32 %v28, %v30
  %v32 = vadd.f32 %v26, %v31
  %s33 = scalar_lea.vmem %s2, 24
  %v34 = vld [vmem:[%s33] sm:$0xff]
  %s35 = sld [smem:[#allocation3 + $0x3]]
  %v36 = vstv %s35
  %v37 = vmul.f32 %v34, %v36
  %v38 = vadd.f32 %v32, %v37
  %s39 = scalar_lea.vmem %s2, 32
  %v40 = vld [vmem:[%s39] sm:$0xff]
  %s41 = sld [smem:[#allocation3 + $0x4]]
  %v42 = vstv %s41
  %v43 = vmul.f32 %v40, %v42
  %v44 = vadd.f32 %v38, %v43
  %s45 = scalar_lea.vmem %s2, 40
  %v46 = vld [vmem:[%s45] sm:$0xff]
  %s47 = sld [smem:[#allocation3 + $0x5]]
  %v48 = vstv %s47
  %v49 = vmul.f32 %v46, %v48
  %v50 = vadd.f32 %v44, %v49
  %s51 = sld [smem:[#allocation4]]
  %v52 = vstv %s51
  %v53 = vadd.f32 %v50, %v52
  %v54 = vxor.u32 %v53, 2147483648
  %v55 = vmul.f32 %v54, 1.442695
  %v56 = vpow.pop %v55
  %v57 = vadd.f32 %v56, 1.0
  %v58 = vrcp.pop %v57
  %v59 = vmul.f32 1.0, %v58
  %60 = vst [vmem:[%s3] sm:$0xff] %v59
  // Predicated region
  $region6: #{binary_classifier.1} parent=0 // pred_check
    _
  $region7: #{binary_classifier.1} parent=0 // pred_check_branch
    %62 = sbr.rel (0) target = $region9
  $region8: #{binary_classifier.1} parent=0 // pred_region
    _
  $region9: #{binary_classifier.1} parent=0 // pred_fallthru
    _
  // Predicated region
  $region10: #{binary_classifier.1} parent=0 // pred_check
    _
  $region11: #{binary_classifier.1} parent=0 // pred_check_branch
    %64 = sbr.rel (0) target = $region13
  $region12: #{binary_classifier.1} parent=0 // pred_region
    _
  $region13: #{binary_classifier.1} parent=0 // pred_fallthru
    _

</llo_original>
